<compile_context>
chip_gen: v7x
topology: tpu7x:2x2x1
jax: 0.10.0
libtpu: 0.0.40
codegen_flags: <defaults>
</compile_context>

<pallas_src>
import functools
import math

import jax
import jax.numpy as jnp
from jax import lax
from jax.experimental import pallas as pl
from jax.experimental.pallas import tpu as pltpu


def _pos_enc_kernel(x_ref, o_ref, *, seq_tile, d_model):
    # Absolute sequence offset of this grid step.
    s0 = pl.program_id(0) * seq_tile

    # Position index along the sequence axis, shaped (seq_tile, 1, D).
    pos = (s0 + lax.broadcasted_iota(jnp.int32, (seq_tile, 1, d_model), 0)
           ).astype(jnp.float32)

    # Channel index along the embed axis, computed only over D: (1, 1, D).
    ch = lax.broadcasted_iota(jnp.int32, (1, 1, d_model), 2)

    # Frequency depends on the pair index:  2*(c//2) == c & ~1.
    # exp(...) is evaluated on D elements only (once per block).
    inv_freq = jnp.exp(
        (ch & ~1).astype(jnp.float32) * (-math.log(10000.0) / d_model)
    )
    # cos(x) = sin(x + pi/2): odd channels get a +pi/2 phase -> single sin.
    phase = (ch & 1).astype(jnp.float32) * (math.pi / 2.0)

    pe = jnp.sin(pos * inv_freq + phase)  # (seq_tile, 1, D), f32

    # Add in f32 (matches the fp32 PyTorch pe buffer), broadcast over batch,
    # single downcast on store.  dropout p=0.0 -> identity, nothing to apply.
    o_ref[...] = (x_ref[...].astype(jnp.float32) + pe).astype(o_ref.dtype)


def _pick_seq_tile(S, B, D, itemsize, target_bytes):
    """Largest divisor of S whose (tile, B, D) block is <= ~target_bytes."""
    row_bytes = max(1, B * D * itemsize)
    target_rows = max(1, target_bytes // row_bytes)
    if S <= target_rows:
        return S
    best, best8 = 1, None
    for t in range(1, int(min(S, target_rows)) + 1):
        if S % t == 0:
            best = t
            if t % 8 == 0:
                best8 = t
    return best8 if best8 is not None else best


def positional_encoding(x, *, seq_tile=None, target_block_bytes=2 << 20):
    """x: [S, B, D] float array. Returns x + sinusoidal PE (same shape/dtype)."""
    S, B, D = x.shape
    assert D % 2 == 0, "d_model must be even (matches the PyTorch pe buffer)"
    itemsize = jnp.dtype(x.dtype).itemsize

    if seq_tile is None:
        seq_tile = _pick_seq_tile(S, B, D, itemsize, target_block_bytes)
    assert S % seq_tile == 0, "seq length must be divisible by seq_tile"

    kernel = functools.partial(_pos_enc_kernel, seq_tile=seq_tile, d_model=D)

    # TODO(synk): for very small B and D (sublane/lane-padded blocks) a
    # wrapper-side reshape to a lane-dense 2D slab would give unmasked stores,
    # at the cost of re-introducing B-fold transcendental work; skipped here.
    return pl.pallas_call(
        kernel,
        out_shape=jax.ShapeDtypeStruct((S, B, D), x.dtype),
        grid_spec=pltpu.PrefetchScalarGridSpec(
            num_scalar_prefetch=0,
            grid=(S // seq_tile,),
            in_specs=[pl.BlockSpec((seq_tile, B, D), lambda s: (s, 0, 0))],
            out_specs=pl.BlockSpec((seq_tile, B, D), lambda s: (s, 0, 0)),
        ),
        compiler_params=pltpu.CompilerParams(
            dimension_semantics=("parallel",),
        ),
        cost_estimate=pl.CostEstimate(
            flops=S * B * D,                      # the broadcast add
            transcendentals=S * D + D,            # one sin per (s, d) + exp over D
            bytes_accessed=2 * S * B * D * itemsize,
        ),
    )(x)


def _reference(x):
    """Pure-JAX reference mirroring the PyTorch module."""
    S, B, D = x.shape
    position = jnp.arange(S, dtype=jnp.float32)[:, None]            # [S, 1]
    div_term = jnp.exp(
        jnp.arange(0, D, 2, dtype=jnp.float32) * (-math.log(10000.0) / D)
    )                                                                # [D/2]
    pe = jnp.zeros((S, D), dtype=jnp.float32)
    pe = pe.at[:, 0::2].set(jnp.sin(position * div_term))
    pe = pe.at[:, 1::2].set(jnp.cos(position * div_term))
    return (x.astype(jnp.float32) + pe[:, None, :]).astype(x.dtype)


if __name__ == "__main__":
    key = jax.random.PRNGKey(0)

    # Test 1: small shapes consistent with the module: [seq=8, batch=2, d_model=32].
    S, B, D = 8, 2, 32
    x = jax.random.normal(key, (S, B, D), dtype=jnp.float32)
    out = jax.block_until_ready(positional_encoding(x))
    ref = _reference(x)
    assert out.shape == (S, B, D) and out.dtype == x.dtype
    assert jnp.allclose(out, ref, atol=1e-4, rtol=1e-5), "mismatch vs reference (test 1)"

    # Test 2: exercise the multi-step pipelined grid path explicitly.
    S2, B2, D2 = 256, 4, 128
    x2 = jax.random.normal(jax.random.PRNGKey(0), (S2, B2, D2), dtype=jnp.float32)
    out2 = jax.block_until_ready(positional_encoding(x2, seq_tile=64))
    ref2 = _reference(x2)
    assert jnp.allclose(out2, ref2, atol=1e-4, rtol=1e-5), "mismatch vs reference (test 2)"

    print("KERNEL_OK")
</pallas_src>

<mosaic_0001>
module attributes {stable_mosaic.version = 11 : i64} {
  func.func @_pos_enc_kernel(%arg0: i32, %arg1: memref<8x2x32xf32, #tpu.memory_space<vmem>>, %arg2: memref<8x2x32xf32, #tpu.memory_space<vmem>>) attributes {dimension_semantics = [#tpu.dimension_semantics<parallel>], iteration_bounds = array<i64: 1>, scalar_prefetch = 0 : i64, scratch_operands = 0 : i64, tpu.core_type = #tpu.core_type<tc>, window_params = [{transform_indices = @transform_0, window_bounds = array<i64: 8, 2, 32>}, {transform_indices = @transform_1, window_bounds = array<i64: 8, 2, 32>}]} {
    %c8_i32 = arith.constant 8 : i32
    %0 = arith.muli %arg0, %c8_i32 : i32
    %1 = tpu.iota {dimensions = array<i32: 0>} : vector<8x1x32xi32>
    %2 = vector.broadcast %0 : i32 to vector<8x1x32xi32>
    %3 = arith.addi %2, %1 : vector<8x1x32xi32>
    %4 = arith.sitofp %3 : vector<8x1x32xi32> to vector<8x1x32xf32>
    %5 = tpu.iota {dimensions = array<i32: 2>} : vector<1x1x32xi32>
    %c-2_i32 = arith.constant -2 : i32
    %6 = vector.broadcast %c-2_i32 : i32 to vector<1x1x32xi32>
    %7 = arith.andi %5, %6 : vector<1x1x32xi32>
    %8 = arith.sitofp %7 : vector<1x1x32xi32> to vector<1x1x32xf32>
    %cst = arith.constant -0.287823141 : f32
    %9 = vector.broadcast %cst : f32 to vector<1x1x32xf32>
    %10 = arith.mulf %8, %9 : vector<1x1x32xf32>
    %11 = math.exp %10 : vector<1x1x32xf32>
    %c1_i32 = arith.constant 1 : i32
    %12 = vector.broadcast %c1_i32 : i32 to vector<1x1x32xi32>
    %13 = arith.andi %5, %12 : vector<1x1x32xi32>
    %14 = arith.sitofp %13 : vector<1x1x32xi32> to vector<1x1x32xf32>
    %cst_0 = arith.constant 1.57079637 : f32
    %15 = vector.broadcast %cst_0 : f32 to vector<1x1x32xf32>
    %16 = arith.mulf %14, %15 : vector<1x1x32xf32>
    %17 = vector.broadcast %11 : vector<1x1x32xf32> to vector<8x1x32xf32>
    %18 = arith.mulf %4, %17 : vector<8x1x32xf32>
    %19 = vector.broadcast %16 : vector<1x1x32xf32> to vector<8x1x32xf32>
    %20 = arith.addf %18, %19 : vector<8x1x32xf32>
    %21 = math.sin %20 : vector<8x1x32xf32>
    %c0 = arith.constant 0 : index
    %c0_1 = arith.constant 0 : index
    %c0_2 = arith.constant 0 : index
    %22 = vector.load %arg1[%c0, %c0_1, %c0_2] : memref<8x2x32xf32, #tpu.memory_space<vmem>>, vector<8x2x32xf32>
    %23 = vector.broadcast %21 : vector<8x1x32xf32> to vector<8x2x32xf32>
    %24 = arith.addf %22, %23 : vector<8x2x32xf32>
    %c0_3 = arith.constant 0 : index
    %c0_4 = arith.constant 0 : index
    %c0_5 = arith.constant 0 : index
    %25 = vector.load %arg2[%c0_3, %c0_4, %c0_5] : memref<8x2x32xf32, #tpu.memory_space<vmem>>, vector<8x2x32xf32>
    tpu.vector_store %arg2[%c0_3, %c0_4, %c0_5], %24 {strides = array<i32>} : memref<8x2x32xf32, #tpu.memory_space<vmem>>, vector<8x2x32xf32>,
    return
  }
  func.func @transform_0(%arg0: i32) -> (i32, i32, i32) {
    %c0_i32 = arith.constant 0 : i32
    %c0_i32_0 = arith.constant 0 : i32
    %c0_i32_1 = arith.constant 0 : i32
    return %arg0, %c0_i32, %c0_i32_0 : i32, i32, i32
  }
  func.func @transform_1(%arg0: i32) -> (i32, i32, i32) {
    %c0_i32 = arith.constant 0 : i32
    %c0_i32_0 = arith.constant 0 : i32
    %c0_i32_1 = arith.constant 0 : i32
    return %arg0, %c0_i32, %c0_i32_0 : i32, i32, i32
  }
}

</mosaic_0001>

<llo_original>
// kernel: tpu_custom_call.1
$region0: #{tpu_custom_call.1}
  #allocation0 [shape = 'u32[]', space=smem, size = 0x4, offset = 0x4, fixed_abs, tag = 'smem constant byte address 0x4 - core index']
  #allocation1 [shape = 'u32[144,128]{1,0:T(1,128)}', space=vmem, size = 0x12000, scoped, tag = 'internal scratch']
  %s0 = inlined_call_operand.hbm [shape: f32[8,2,32], index: 0, kind: input, shape index: {}]
  %s1 = inlined_call_operand.hbm [shape: f32[8,2,32], index: 1, kind: output, shape index: {}]
  %s2 = sld [smem:[#allocation0]]
  $region18: #{tpu_custom_call.1} parent=0
    _
  %s4 = ssub.s32 1, %s2
  %s5 = scalar_select 0, %s4, %s2
  $region1: #{tpu_custom_call.1} parent=0
    #allocation2 [shape = 'u8[8192]{0}', space=vmem, size = 0x2000, scoped, tag = 'input window, operand 0, single buffered']
    #allocation3 [shape = 's32[1]{0}', space=sflag, size = 0x4, scoped, tag = 'scoped memory for tpu_custom_call.1']
    #allocation4 [shape = 's32[1]{0}', space=sflag, size = 0x4, scoped, tag = 'scoped memory for tpu_custom_call.1']
    #allocation5 [shape = 'u8[8192]{0}', space=vmem, size = 0x2000, scoped, tag = 'output window, operand 0, single buffered']
    %6 = vsyncpa [#allocation3], 0
    %7 = vsyncpa [#allocation4], 0
    // Predicated region
    $region2: #{tpu_custom_call.1} parent=1 // pred_check
      _
    $region3: #{tpu_custom_call.1} parent=1 // pred_check_branch
      %9 = sbr.rel (0) target = $region5
    $region4: #{tpu_custom_call.1} parent=1 // pred_region
      %s11 = ssub.s32 256, 256
      %12 = vsyncadd [#allocation3], %s11
      %s13 = sshll.u32 [#allocation2], 4
      %s14 = int_to_ptr.vmem [resolvable:$true] %s13
      %19 = dma.hbm_to_vmem [thread:$0]  %s0, 256, %s14, [#allocation3], 32, 32, 2
    $region5: #{tpu_custom_call.1} parent=1 // pred_fallthru
      _
    // Predicated region
    $region6: #{tpu_custom_call.1} parent=1 // pred_check
      _
    $region7: #{tpu_custom_call.1} parent=1 // pred_check_branch
      %21 = sbr.rel (0) target = $region9
    $region8: #{tpu_custom_call.1} parent=1 // pred_region
      %22 = dma.done [#allocation3], 256
    $region9: #{tpu_custom_call.1} parent=1 // pred_fallthru
      _
    %s23 = smul.u32 0, 8
    %v24 = vstv %s23
    %v25 = vadd.s32 %v24, 1
    %v26 = vadd.s32 %v24, 2
    %v27 = vadd.s32 %v24, 3
    %v28 = vadd.s32 %v24, 4
    %v29 = vadd.s32 %v24, 5
    %v30 = vadd.s32 %v24, 6
    %v31 = vadd.s32 %v24, 7
    %v32 = vcvt.s32.f32 %v24
    %v33 = vcvt.s32.f32 %v25
    %v34 = vcvt.s32.f32 %v26
    %v35 = vcvt.s32.f32 %v27
    %v36 = vcvt.s32.f32 %v28
    %v37 = vcvt.s32.f32 %v29
    %v38 = vcvt.s32.f32 %v30
    %v39 = vcvt.s32.f32 %v31
    %v40 = vlaneseq
    %v41 = vand.u32 %v40, 127
    %v42 = vand.u32 %v41, 4294967294
    %v43 = vcvt.s32.f32 %v42
    %v44 = vmul.f32 %v43, -0.28782314
    %v45 = vmul.f32 %v44, 1.442695
    %v46 = vpow.pop %v45
    %v47 = vand.u32 %v41, 1
    %v48 = vcvt.s32.f32 %v47
    %v49 = vmul.f32 %v48, 1.5707964
    %v50 = vmul.f32 %v32, %v46
    %v51 = vmul.f32 %v33, %v46
    %v52 = vmul.f32 %v34, %v46
    %v53 = vmul.f32 %v35, %v46
    %v54 = vmul.f32 %v36, %v46
    %v55 = vmul.f32 %v37, %v46
    %v56 = vmul.f32 %v38, %v46
    %v57 = vmul.f32 %v39, %v46
    %v58 = vadd.f32 %v50, %v49
    %v59 = vadd.f32 %v51, %v49
    %v60 = vadd.f32 %v52, %v49
    %v61 = vadd.f32 %v53, %v49
    %v62 = vadd.f32 %v54, %v49
    %v63 = vadd.f32 %v55, %v49
    %v64 = vadd.f32 %v56, %v49
    %v65 = vadd.f32 %v57, %v49
    %v66 = vand.u32 2147483647, %v58
    %vm67 = vcmp.le.f32.partialorder %v66, 0.7853982
    %vm68 = vcmp.lt.s32.totalorder %v58, 0
    %v69 = vand.u32 %v58, 2139095040
    %v70 = vshrl.u32 %v69, 23
    %v71 = vsub.s32 %v70, 127
    %v72 = vand.u32 2147483647, %v58
    %v73 = vand.u32 %v72, 8388607
    %v74 = vor.u32 %v73, 8388608
    %v75 = vsub.s32 0, %v74
    %v76 = vadd.s32 %v71, 1
    %vm77 = vcmp.gt.s32.totalorder %v76, 0
    %v78 = vsel %vm77, %v76, 0
    %v79 = vshrl.u32 %v78, 5
    %v80 = vand.u32 %v78, 31
    %v81 = vsub.s32 32, %v80
    %v82 = vshrl.u32 683565275, %v81
    %v83 = vshll.u32 683565275, %v80
    %v84 = vshrl.u32 2475754826, %v81
    %v85 = vor.u32 %v83, %v84
    %v86 = vshll.u32 2475754826, %v80
    %v87 = vshrl.u32 2131351028, %v81
    %v88 = vor.u32 %v86, %v87
    %v89 = vshll.u32 2131351028, %v80
    %v90 = vshrl.u32 2102212464, %v81
    %v91 = vor.u32 %v89, %v90
    %v92 = vshll.u32 2102212464, %v80
    %v93 = vshrl.u32 920167782, %v81
    %v94 = vor.u32 %v92, %v93
    %v95 = vshll.u32 920167782, %v80
    %v96 = vshrl.u32 1326507024, %v81
    %v97 = vor.u32 %v95, %v96
    %vm98 = vcmp.lt.s32.totalorder %v79, 1
    %vm99 = vcmp.lt.s32.totalorder %v79, 2
    %vm100 = vcmp.lt.s32.totalorder %v79, 3
    %vm101 = vcmp.lt.s32.totalorder %v79, 4
    %v102 = vsel %vm98, %v82, %v85
    %v103 = vsel %vm101, %v91, 2102212464
    %v104 = vsel %vm100, %v88, %v103
    %v105 = vsel %vm99, %v102, %v104
    %v106 = vsel %vm98, %v85, %v88
    %v107 = vsel %vm101, %v94, 920167782
    %v108 = vsel %vm100, %v91, %v107
    %v109 = vsel %vm99, %v106, %v108
    %v110 = vsel %vm98, %v88, %v91
    %v111 = vsel %vm101, %v97, 1326507024
    %v112 = vsel %vm100, %v94, %v111
    %v113 = vsel %vm99, %v110, %v112
    %v114 = vshll.u32 %v74, 8
    %v115 = vmul.u32.u64.compose %v114, %v113
    %v116 = vextract.low.u32 %v115
    %v117 = vextract.high.u32 %v115
    %v118 = vmul.u32.u64.compose %v114, %v109
    %v119 = vextract.low.u32 %v118
    %v120 = vextract.high.u32 %v118
    %v121 = vmul.u32 %v114, %v105
    %v122 = vadd.s32 %v117, %v119
    %vm123 = vc.u32 %v117, %v119
    %v124 = vadd.s32 %v120, 1
    %v125 = vsel %vm123, %v124, %v120
    %v126 = vadd.s32 %v121, %v125
    %v127 = vadd.s32 %v126, 536870912
    %v128 = vshrl.u32 %v127, 30
    %v129 = vshll.u32 %v128, 30
    %v130 = vsub.s32 %v126, %v129
    %vm131 = vcmp.lt.s32.totalorder %v130, 0
    %v132 = vsub.s32 0, %v130
    %v133 = vsel %vm131, %v132, %v130
    %v134 = vclz %v133
    %v135 = vsub.s32 %v134, 2
    %vm136 = vcmp.gt.s32.totalorder 0, %v135
    %v137 = vsel %vm136, 0, %v135
    %v138 = vsub.s32 32, %v137
    %v139 = vshll.u32 %v130, %v137
    %v140 = vshrl.u32 %v122, %v138
    %v141 = vor.u32 %v139, %v140
    %v142 = vsub.s32 4294967266, %v137
    %v143 = vadd.s32 %v142, 127
    %v144 = vshll.u32 %v143, 23
    %v145 = vor.u32 4788187, %v144
    %v146 = vand.u32 2147483647, %v145
    %v148 = vcvt.s32.f32 %v141
    %v149 = vmul.f32 %v148, %v146
    %v150 = vxor.u32 %v149, 2147483648
    %v151 = vsel %vm68, %v150, %v149
    %v152 = vsub.s32 4, %v128
    %v153 = vsel %vm68, %v152, %v128
    %v154 = vsel %vm67, %v58, %v151
    %v155 = vsel %vm67, 0, %v153
    %v156 = vcosq.f32.pop %v154
    %v157 = vsinq.f32.pop %v154
    %vm158 = vweird.f32 %v58
    %v159 = vadd.s32 %v155, 3
    %v160 = vand.u32 %v159, 3
    %vm161 = vcmp.lt.s32.totalorder %v160, 2
    %vm162 = vcmp.eq.s32.totalorder %v160, 0
    %v163 = vxor.u32 %v157, 2147483648
    %v164 = vsel %vm162, %v156, %v163
    %vm165 = vcmp.eq.s32.totalorder %v160, 2
    %v166 = vxor.u32 %v156, 2147483648
    %v167 = vsel %vm165, %v166, %v157
    %v168 = vsel %vm161, %v164, %v167
    %v169 = vsel %vm158, nan, %v168
    %v170 = vand.u32 2147483647, %v59
    %vm171 = vcmp.le.f32.partialorder %v170, 0.7853982
    %vm172 = vcmp.lt.s32.totalorder %v59, 0
    %v173 = vand.u32 %v59, 2139095040
    %v174 = vshrl.u32 %v173, 23
    %v175 = vsub.s32 %v174, 127
    %v176 = vand.u32 2147483647, %v59
    %v177 = vand.u32 %v176, 8388607
    %v178 = vor.u32 %v177, 8388608
    %v179 = vsub.s32 0, %v178
    %v180 = vadd.s32 %v175, 1
    %vm181 = vcmp.gt.s32.totalorder %v180, 0
    %v182 = vsel %vm181, %v180, 0
    %v183 = vshrl.u32 %v182, 5
    %v184 = vand.u32 %v182, 31
    %v185 = vsub.s32 32, %v184
    %v186 = vshrl.u32 683565275, %v185
    %v187 = vshll.u32 683565275, %v184
    %v188 = vshrl.u32 2475754826, %v185
    %v189 = vor.u32 %v187, %v188
    %v190 = vshll.u32 2475754826, %v184
    %v191 = vshrl.u32 2131351028, %v185
    %v192 = vor.u32 %v190, %v191
    %v193 = vshll.u32 2131351028, %v184
    %v194 = vshrl.u32 2102212464, %v185
    %v195 = vor.u32 %v193, %v194
    %v196 = vshll.u32 2102212464, %v184
    %v197 = vshrl.u32 920167782, %v185
    %v198 = vor.u32 %v196, %v197
    %v199 = vshll.u32 920167782, %v184
    %v200 = vshrl.u32 1326507024, %v185
    %v201 = vor.u32 %v199, %v200
    %vm202 = vcmp.lt.s32.totalorder %v183, 1
    %vm203 = vcmp.lt.s32.totalorder %v183, 2
    %vm204 = vcmp.lt.s32.totalorder %v183, 3
    %vm205 = vcmp.lt.s32.totalorder %v183, 4
    %v206 = vsel %vm202, %v186, %v189
    %v207 = vsel %vm205, %v195, 2102212464
    %v208 = vsel %vm204, %v192, %v207
    %v209 = vsel %vm203, %v206, %v208
    %v210 = vsel %vm202, %v189, %v192
    %v211 = vsel %vm205, %v198, 920167782
    %v212 = vsel %vm204, %v195, %v211
    %v213 = vsel %vm203, %v210, %v212
    %v214 = vsel %vm202, %v192, %v195
    %v215 = vsel %vm205, %v201, 1326507024
    %v216 = vsel %vm204, %v198, %v215
    %v217 = vsel %vm203, %v214, %v216
    %v218 = vshll.u32 %v178, 8
    %v219 = vmul.u32.u64.compose %v218, %v217
    %v220 = vextract.low.u32 %v219
    %v221 = vextract.high.u32 %v219
    %v222 = vmul.u32.u64.compose %v218, %v213
    %v223 = vextract.low.u32 %v222
    %v224 = vextract.high.u32 %v222
    %v225 = vmul.u32 %v218, %v209
    %v226 = vadd.s32 %v221, %v223
    %vm227 = vc.u32 %v221, %v223
    %v228 = vadd.s32 %v224, 1
    %v229 = vsel %vm227, %v228, %v224
    %v230 = vadd.s32 %v225, %v229
    %v231 = vadd.s32 %v230, 536870912
    %v232 = vshrl.u32 %v231, 30
    %v233 = vshll.u32 %v232, 30
    %v234 = vsub.s32 %v230, %v233
    %vm235 = vcmp.lt.s32.totalorder %v234, 0
    %v236 = vsub.s32 0, %v234
    %v237 = vsel %vm235, %v236, %v234
    %v238 = vclz %v237
    %v239 = vsub.s32 %v238, 2
    %vm240 = vcmp.gt.s32.totalorder 0, %v239
    %v241 = vsel %vm240, 0, %v239
    %v242 = vsub.s32 32, %v241
    %v243 = vshll.u32 %v234, %v241
    %v244 = vshrl.u32 %v226, %v242
    %v245 = vor.u32 %v243, %v244
    %v246 = vsub.s32 4294967266, %v241
    %v247 = vadd.s32 %v246, 127
    %v248 = vshll.u32 %v247, 23
    %v249 = vor.u32 4788187, %v248
    %v250 = vand.u32 2147483647, %v249
    %v252 = vcvt.s32.f32 %v245
    %v253 = vmul.f32 %v252, %v250
    %v254 = vxor.u32 %v253, 2147483648
    %v255 = vsel %vm172, %v254, %v253
    %v256 = vsub.s32 4, %v232
    %v257 = vsel %vm172, %v256, %v232
    %v258 = vsel %vm171, %v59, %v255
    %v259 = vsel %vm171, 0, %v257
    %v260 = vcosq.f32.pop %v258
    %v261 = vsinq.f32.pop %v258
    %vm262 = vweird.f32 %v59
    %v263 = vadd.s32 %v259, 3
    %v264 = vand.u32 %v263, 3
    %vm265 = vcmp.lt.s32.totalorder %v264, 2
    %vm266 = vcmp.eq.s32.totalorder %v264, 0
    %v267 = vxor.u32 %v261, 2147483648
    %v268 = vsel %vm266, %v260, %v267
    %vm269 = vcmp.eq.s32.totalorder %v264, 2
    %v270 = vxor.u32 %v260, 2147483648
    %v271 = vsel %vm269, %v270, %v261
    %v272 = vsel %vm265, %v268, %v271
    %v273 = vsel %vm262, nan, %v272
    %v274 = vand.u32 2147483647, %v60
    %vm275 = vcmp.le.f32.partialorder %v274, 0.7853982
    %vm276 = vcmp.lt.s32.totalorder %v60, 0
    %v277 = vand.u32 %v60, 2139095040
    %v278 = vshrl.u32 %v277, 23
    %v279 = vsub.s32 %v278, 127
    %v280 = vand.u32 2147483647, %v60
    %v281 = vand.u32 %v280, 8388607
    %v282 = vor.u32 %v281, 8388608
    %v283 = vsub.s32 0, %v282
    %v284 = vadd.s32 %v279, 1
    %vm285 = vcmp.gt.s32.totalorder %v284, 0
    %v286 = vsel %vm285, %v284, 0
    %v287 = vshrl.u32 %v286, 5
    %v288 = vand.u32 %v286, 31
    %v289 = vsub.s32 32, %v288
    %v290 = vshrl.u32 683565275, %v289
    %v291 = vshll.u32 683565275, %v288
    %v292 = vshrl.u32 2475754826, %v289
    %v293 = vor.u32 %v291, %v292
    %v294 = vshll.u32 2475754826, %v288
    %v295 = vshrl.u32 2131351028, %v289
    %v296 = vor.u32 %v294, %v295
    %v297 = vshll.u32 2131351028, %v288
    %v298 = vshrl.u32 2102212464, %v289
    %v299 = vor.u32 %v297, %v298
    %v300 = vshll.u32 2102212464, %v288
    %v301 = vshrl.u32 920167782, %v289
    %v302 = vor.u32 %v300, %v301
    %v303 = vshll.u32 920167782, %v288
    %v304 = vshrl.u32 1326507024, %v289
    %v305 = vor.u32 %v303, %v304
    %vm306 = vcmp.lt.s32.totalorder %v287, 1
    %vm307 = vcmp.lt.s32.totalorder %v287, 2
    %vm308 = vcmp.lt.s32.totalorder %v287, 3
    %vm309 = vcmp.lt.s32.totalorder %v287, 4
    %v310 = vsel %vm306, %v290, %v293
    %v311 = vsel %vm309, %v299, 2102212464
    %v312 = vsel %vm308, %v296, %v311
    %v313 = vsel %vm307, %v310, %v312
    %v314 = vsel %vm306, %v293, %v296
    %v315 = vsel %vm309, %v302, 920167782
    %v316 = vsel %vm308, %v299, %v315
    %v317 = vsel %vm307, %v314, %v316
    %v318 = vsel %vm306, %v296, %v299
    %v319 = vsel %vm309, %v305, 1326507024
    %v320 = vsel %vm308, %v302, %v319
    %v321 = vsel %vm307, %v318, %v320
    %v322 = vshll.u32 %v282, 8
    %v323 = vmul.u32.u64.compose %v322, %v321
    %v324 = vextract.low.u32 %v323
    %v325 = vextract.high.u32 %v323
    %v326 = vmul.u32.u64.compose %v322, %v317
    %v327 = vextract.low.u32 %v326
    %v328 = vextract.high.u32 %v326
    %v329 = vmul.u32 %v322, %v313
    %v330 = vadd.s32 %v325, %v327
    %vm331 = vc.u32 %v325, %v327
    %v332 = vadd.s32 %v328, 1
    %v333 = vsel %vm331, %v332, %v328
    %v334 = vadd.s32 %v329, %v333
    %v335 = vadd.s32 %v334, 536870912
    %v336 = vshrl.u32 %v335, 30
    %v337 = vshll.u32 %v336, 30
    %v338 = vsub.s32 %v334, %v337
    %vm339 = vcmp.lt.s32.totalorder %v338, 0
    %v340 = vsub.s32 0, %v338
    %v341 = vsel %vm339, %v340, %v338
    %v342 = vclz %v341
    %v343 = vsub.s32 %v342, 2
    %vm344 = vcmp.gt.s32.totalorder 0, %v343
    %v345 = vsel %vm344, 0, %v343
    %v346 = vsub.s32 32, %v345
    %v347 = vshll.u32 %v338, %v345
    %v348 = vshrl.u32 %v330, %v346
    %v349 = vor.u32 %v347, %v348
    %v350 = vsub.s32 4294967266, %v345
    %v351 = vadd.s32 %v350, 127
    %v352 = vshll.u32 %v351, 23
    %v353 = vor.u32 4788187, %v352
    %v354 = vand.u32 2147483647, %v353
    %v356 = vcvt.s32.f32 %v349
    %v357 = vmul.f32 %v356, %v354
    %v358 = vxor.u32 %v357, 2147483648
    %v359 = vsel %vm276, %v358, %v357
    %v360 = vsub.s32 4, %v336
    %v361 = vsel %vm276, %v360, %v336
    %v362 = vsel %vm275, %v60, %v359
    %v363 = vsel %vm275, 0, %v361
    %v364 = vcosq.f32.pop %v362
    %v365 = vsinq.f32.pop %v362
    %vm366 = vweird.f32 %v60
    %v367 = vadd.s32 %v363, 3
    %v368 = vand.u32 %v367, 3
    %vm369 = vcmp.lt.s32.totalorder %v368, 2
    %vm370 = vcmp.eq.s32.totalorder %v368, 0
    %v371 = vxor.u32 %v365, 2147483648
    %v372 = vsel %vm370, %v364, %v371
    %vm373 = vcmp.eq.s32.totalorder %v368, 2
    %v374 = vxor.u32 %v364, 2147483648
    %v375 = vsel %vm373, %v374, %v365
    %v376 = vsel %vm369, %v372, %v375
    %v377 = vsel %vm366, nan, %v376
    %v378 = vand.u32 2147483647, %v61
    %vm379 = vcmp.le.f32.partialorder %v378, 0.7853982
    %vm380 = vcmp.lt.s32.totalorder %v61, 0
    %v381 = vand.u32 %v61, 2139095040
    %v382 = vshrl.u32 %v381, 23
    %v383 = vsub.s32 %v382, 127
    %v384 = vand.u32 2147483647, %v61
    %v385 = vand.u32 %v384, 8388607
    %v386 = vor.u32 %v385, 8388608
    %v387 = vsub.s32 0, %v386
    %v388 = vadd.s32 %v383, 1
    %vm389 = vcmp.gt.s32.totalorder %v388, 0
    %v390 = vsel %vm389, %v388, 0
    %v391 = vshrl.u32 %v390, 5
    %v392 = vand.u32 %v390, 31
    %v393 = vsub.s32 32, %v392
    %v394 = vshrl.u32 683565275, %v393
    %v395 = vshll.u32 683565275, %v392
    %v396 = vshrl.u32 2475754826, %v393
    %v397 = vor.u32 %v395, %v396
    %v398 = vshll.u32 2475754826, %v392
    %v399 = vshrl.u32 2131351028, %v393
    %v400 = vor.u32 %v398, %v399
    %v401 = vshll.u32 2131351028, %v392
    %v402 = vshrl.u32 2102212464, %v393
    %v403 = vor.u32 %v401, %v402
    %v404 = vshll.u32 2102212464, %v392
    %v405 = vshrl.u32 920167782, %v393
    %v406 = vor.u32 %v404, %v405
    %v407 = vshll.u32 920167782, %v392
    %v408 = vshrl.u32 1326507024, %v393
    %v409 = vor.u32 %v407, %v408
    %vm410 = vcmp.lt.s32.totalorder %v391, 1
    %vm411 = vcmp.lt.s32.totalorder %v391, 2
    %vm412 = vcmp.lt.s32.totalorder %v391, 3
    %vm413 = vcmp.lt.s32.totalorder %v391, 4
    %v414 = vsel %vm410, %v394, %v397
    %v415 = vsel %vm413, %v403, 2102212464
    %v416 = vsel %vm412, %v400, %v415
    %v417 = vsel %vm411, %v414, %v416
    %v418 = vsel %vm410, %v397, %v400
    %v419 = vsel %vm413, %v406, 920167782
    %v420 = vsel %vm412, %v403, %v419
    %v421 = vsel %vm411, %v418, %v420
    %v422 = vsel %vm410, %v400, %v403
    %v423 = vsel %vm413, %v409, 1326507024
    %v424 = vsel %vm412, %v406, %v423
    %v425 = vsel %vm411, %v422, %v424
    %v426 = vshll.u32 %v386, 8
    %v427 = vmul.u32.u64.compose %v426, %v425
    %v428 = vextract.low.u32 %v427
    %v429 = vextract.high.u32 %v427
    %v430 = vmul.u32.u64.compose %v426, %v421
    %v431 = vextract.low.u32 %v430
    %v432 = vextract.high.u32 %v430
    %v433 = vmul.u32 %v426, %v417
    %v434 = vadd.s32 %v429, %v431
    %vm435 = vc.u32 %v429, %v431
    %v436 = vadd.s32 %v432, 1
    %v437 = vsel %vm435, %v436, %v432
    %v438 = vadd.s32 %v433, %v437
    %v439 = vadd.s32 %v438, 536870912
    %v440 = vshrl.u32 %v439, 30
    %v441 = vshll.u32 %v440, 30
    %v442 = vsub.s32 %v438, %v441
    %vm443 = vcmp.lt.s32.totalorder %v442, 0
    %v444 = vsub.s32 0, %v442
    %v445 = vsel %vm443, %v444, %v442
    %v446 = vclz %v445
    %v447 = vsub.s32 %v446, 2
    %vm448 = vcmp.gt.s32.totalorder 0, %v447
    %v449 = vsel %vm448, 0, %v447
    %v450 = vsub.s32 32, %v449
    %v451 = vshll.u32 %v442, %v449
    %v452 = vshrl.u32 %v434, %v450
    %v453 = vor.u32 %v451, %v452
    %v454 = vsub.s32 4294967266, %v449
    %v455 = vadd.s32 %v454, 127
    %v456 = vshll.u32 %v455, 23
    %v457 = vor.u32 4788187, %v456
    %v458 = vand.u32 2147483647, %v457
    %v460 = vcvt.s32.f32 %v453
    %v461 = vmul.f32 %v460, %v458
    %v462 = vxor.u32 %v461, 2147483648
    %v463 = vsel %vm380, %v462, %v461
    %v464 = vsub.s32 4, %v440
    %v465 = vsel %vm380, %v464, %v440
    %v466 = vsel %vm379, %v61, %v463
    %v467 = vsel %vm379, 0, %v465
    %v468 = vcosq.f32.pop %v466
    %v469 = vsinq.f32.pop %v466
    %vm470 = vweird.f32 %v61
    %v471 = vadd.s32 %v467, 3
    %v472 = vand.u32 %v471, 3
    %vm473 = vcmp.lt.s32.totalorder %v472, 2
    %vm474 = vcmp.eq.s32.totalorder %v472, 0
    %v475 = vxor.u32 %v469, 2147483648
    %v476 = vsel %vm474, %v468, %v475
    %vm477 = vcmp.eq.s32.totalorder %v472, 2
    %v478 = vxor.u32 %v468, 2147483648
    %v479 = vsel %vm477, %v478, %v469
    %v480 = vsel %vm473, %v476, %v479
    %v481 = vsel %vm470, nan, %v480
    %v482 = vand.u32 2147483647, %v62
    %vm483 = vcmp.le.f32.partialorder %v482, 0.7853982
    %vm484 = vcmp.lt.s32.totalorder %v62, 0
    %v485 = vand.u32 %v62, 2139095040
    %v486 = vshrl.u32 %v485, 23
    %v487 = vsub.s32 %v486, 127
    %v488 = vand.u32 2147483647, %v62
    %v489 = vand.u32 %v488, 8388607
    %v490 = vor.u32 %v489, 8388608
    %v491 = vsub.s32 0, %v490
    %v492 = vadd.s32 %v487, 1
    %vm493 = vcmp.gt.s32.totalorder %v492, 0
    %v494 = vsel %vm493, %v492, 0
    %v495 = vshrl.u32 %v494, 5
    %v496 = vand.u32 %v494, 31
    %v497 = vsub.s32 32, %v496
    %v498 = vshrl.u32 683565275, %v497
    %v499 = vshll.u32 683565275, %v496
    %v500 = vshrl.u32 2475754826, %v497
    %v501 = vor.u32 %v499, %v500
    %v502 = vshll.u32 2475754826, %v496
    %v503 = vshrl.u32 2131351028, %v497
    %v504 = vor.u32 %v502, %v503
    %v505 = vshll.u32 2131351028, %v496
    %v506 = vshrl.u32 2102212464, %v497
    %v507 = vor.u32 %v505, %v506
    %v508 = vshll.u32 2102212464, %v496
    %v509 = vshrl.u32 920167782, %v497
    %v510 = vor.u32 %v508, %v509
    %v511 = vshll.u32 920167782, %v496
    %v512 = vshrl.u32 1326507024, %v497
    %v513 = vor.u32 %v511, %v512
    %vm514 = vcmp.lt.s32.totalorder %v495, 1
    %vm515 = vcmp.lt.s32.totalorder %v495, 2
    %vm516 = vcmp.lt.s32.totalorder %v495, 3
    %vm517 = vcmp.lt.s32.totalorder %v495, 4
    %v518 = vsel %vm514, %v498, %v501
    %v519 = vsel %vm517, %v507, 2102212464
    %v520 = vsel %vm516, %v504, %v519
    %v521 = vsel %vm515, %v518, %v520
    %v522 = vsel %vm514, %v501, %v504
    %v523 = vsel %vm517, %v510, 920167782
    %v524 = vsel %vm516, %v507, %v523
    %v525 = vsel %vm515, %v522, %v524
    %v526 = vsel %vm514, %v504, %v507
    %v527 = vsel %vm517, %v513, 1326507024
    %v528 = vsel %vm516, %v510, %v527
    %v529 = vsel %vm515, %v526, %v528
    %v530 = vshll.u32 %v490, 8
    %v531 = vmul.u32.u64.compose %v530, %v529
    %v532 = vextract.low.u32 %v531
    %v533 = vextract.high.u32 %v531
    %v534 = vmul.u32.u64.compose %v530, %v525
    %v535 = vextract.low.u32 %v534
    %v536 = vextract.high.u32 %v534
    %v537 = vmul.u32 %v530, %v521
    %v538 = vadd.s32 %v533, %v535
    %vm539 = vc.u32 %v533, %v535
    %v540 = vadd.s32 %v536, 1
    %v541 = vsel %vm539, %v540, %v536
    %v542 = vadd.s32 %v537, %v541
    %v543 = vadd.s32 %v542, 536870912
    %v544 = vshrl.u32 %v543, 30
    %v545 = vshll.u32 %v544, 30
    %v546 = vsub.s32 %v542, %v545
    %vm547 = vcmp.lt.s32.totalorder %v546, 0
    %v548 = vsub.s32 0, %v546
    %v549 = vsel %vm547, %v548, %v546
    %v550 = vclz %v549
    %v551 = vsub.s32 %v550, 2
    %vm552 = vcmp.gt.s32.totalorder 0, %v551
    %v553 = vsel %vm552, 0, %v551
    %v554 = vsub.s32 32, %v553
    %v555 = vshll.u32 %v546, %v553
    %v556 = vshrl.u32 %v538, %v554
    %v557 = vor.u32 %v555, %v556
    %v558 = vsub.s32 4294967266, %v553
    %v559 = vadd.s32 %v558, 127
    %v560 = vshll.u32 %v559, 23
    %v561 = vor.u32 4788187, %v560
    %v562 = vand.u32 2147483647, %v561
    %v564 = vcvt.s32.f32 %v557
    %v565 = vmul.f32 %v564, %v562
    %v566 = vxor.u32 %v565, 2147483648
    %v567 = vsel %vm484, %v566, %v565
    %v568 = vsub.s32 4, %v544
    %v569 = vsel %vm484, %v568, %v544
    %v570 = vsel %vm483, %v62, %v567
    %v571 = vsel %vm483, 0, %v569
    %v572 = vcosq.f32.pop %v570
    %v573 = vsinq.f32.pop %v570
    %vm574 = vweird.f32 %v62
    %v575 = vadd.s32 %v571, 3
    %v576 = vand.u32 %v575, 3
    %vm577 = vcmp.lt.s32.totalorder %v576, 2
    %vm578 = vcmp.eq.s32.totalorder %v576, 0
    %v579 = vxor.u32 %v573, 2147483648
    %v580 = vsel %vm578, %v572, %v579
    %vm581 = vcmp.eq.s32.totalorder %v576, 2
    %v582 = vxor.u32 %v572, 2147483648
    %v583 = vsel %vm581, %v582, %v573
    %v584 = vsel %vm577, %v580, %v583
    %v585 = vsel %vm574, nan, %v584
    %v586 = vand.u32 2147483647, %v63
    %vm587 = vcmp.le.f32.partialorder %v586, 0.7853982
    %vm588 = vcmp.lt.s32.totalorder %v63, 0
    %v589 = vand.u32 %v63, 2139095040
    %v590 = vshrl.u32 %v589, 23
    %v591 = vsub.s32 %v590, 127
    %v592 = vand.u32 2147483647, %v63
    %v593 = vand.u32 %v592, 8388607
    %v594 = vor.u32 %v593, 8388608
    %v595 = vsub.s32 0, %v594
    %v596 = vadd.s32 %v591, 1
    %vm597 = vcmp.gt.s32.totalorder %v596, 0
    %v598 = vsel %vm597, %v596, 0
    %v599 = vshrl.u32 %v598, 5
    %v600 = vand.u32 %v598, 31
    %v601 = vsub.s32 32, %v600
    %v602 = vshrl.u32 683565275, %v601
    %v603 = vshll.u32 683565275, %v600
    %v604 = vshrl.u32 2475754826, %v601
    %v605 = vor.u32 %v603, %v604
    %v606 = vshll.u32 2475754826, %v600
    %v607 = vshrl.u32 2131351028, %v601
    %v608 = vor.u32 %v606, %v607
    %v609 = vshll.u32 2131351028, %v600
    %v610 = vshrl.u32 2102212464, %v601
    %v611 = vor.u32 %v609, %v610
    %v612 = vshll.u32 2102212464, %v600
    %v613 = vshrl.u32 920167782, %v601
    %v614 = vor.u32 %v612, %v613
    %v615 = vshll.u32 920167782, %v600
    %v616 = vshrl.u32 1326507024, %v601
    %v617 = vor.u32 %v615, %v616
    %vm618 = vcmp.lt.s32.totalorder %v599, 1
    %vm619 = vcmp.lt.s32.totalorder %v599, 2
    %vm620 = vcmp.lt.s32.totalorder %v599, 3
    %vm621 = vcmp.lt.s32.totalorder %v599, 4
    %v622 = vsel %vm618, %v602, %v605
    %v623 = vsel %vm621, %v611, 2102212464
    %v624 = vsel %vm620, %v608, %v623
    %v625 = vsel %vm619, %v622, %v624
    %v626 = vsel %vm618, %v605, %v608
    %v627 = vsel %vm621, %v614, 920167782
    %v628 = vsel %vm620, %v611, %v627
    %v629 = vsel %vm619, %v626, %v628
    %v630 = vsel %vm618, %v608, %v611
    %v631 = vsel %vm621, %v617, 1326507024
    %v632 = vsel %vm620, %v614, %v631
    %v633 = vsel %vm619, %v630, %v632
    %v634 = vshll.u32 %v594, 8
    %v635 = vmul.u32.u64.compose %v634, %v633
    %v636 = vextract.low.u32 %v635
    %v637 = vextract.high.u32 %v635
    %v638 = vmul.u32.u64.compose %v634, %v629
    %v639 = vextract.low.u32 %v638
    %v640 = vextract.high.u32 %v638
    %v641 = vmul.u32 %v634, %v625
    %v642 = vadd.s32 %v637, %v639
    %vm643 = vc.u32 %v637, %v639
    %v644 = vadd.s32 %v640, 1
    %v645 = vsel %vm643, %v644, %v640
    %v646 = vadd.s32 %v641, %v645
    %v647 = vadd.s32 %v646, 536870912
    %v648 = vshrl.u32 %v647, 30
    %v649 = vshll.u32 %v648, 30
    %v650 = vsub.s32 %v646, %v649
    %vm651 = vcmp.lt.s32.totalorder %v650, 0
    %v652 = vsub.s32 0, %v650
    %v653 = vsel %vm651, %v652, %v650
    %v654 = vclz %v653
    %v655 = vsub.s32 %v654, 2
    %vm656 = vcmp.gt.s32.totalorder 0, %v655
    %v657 = vsel %vm656, 0, %v655
    %v658 = vsub.s32 32, %v657
    %v659 = vshll.u32 %v650, %v657
    %v660 = vshrl.u32 %v642, %v658
    %v661 = vor.u32 %v659, %v660
    %v662 = vsub.s32 4294967266, %v657
    %v663 = vadd.s32 %v662, 127
    %v664 = vshll.u32 %v663, 23
    %v665 = vor.u32 4788187, %v664
    %v666 = vand.u32 2147483647, %v665
    %v668 = vcvt.s32.f32 %v661
    %v669 = vmul.f32 %v668, %v666
    %v670 = vxor.u32 %v669, 2147483648
    %v671 = vsel %vm588, %v670, %v669
    %v672 = vsub.s32 4, %v648
    %v673 = vsel %vm588, %v672, %v648
    %v674 = vsel %vm587, %v63, %v671
    %v675 = vsel %vm587, 0, %v673
    %v676 = vcosq.f32.pop %v674
    %v677 = vsinq.f32.pop %v674
    %vm678 = vweird.f32 %v63
    %v679 = vadd.s32 %v675, 3
    %v680 = vand.u32 %v679, 3
    %vm681 = vcmp.lt.s32.totalorder %v680, 2
    %vm682 = vcmp.eq.s32.totalorder %v680, 0
    %v683 = vxor.u32 %v677, 2147483648
    %v684 = vsel %vm682, %v676, %v683
    %vm685 = vcmp.eq.s32.totalorder %v680, 2
    %v686 = vxor.u32 %v676, 2147483648
    %v687 = vsel %vm685, %v686, %v677
    %v688 = vsel %vm681, %v684, %v687
    %v689 = vsel %vm678, nan, %v688
    %v690 = vand.u32 2147483647, %v64
    %vm691 = vcmp.le.f32.partialorder %v690, 0.7853982
    %vm692 = vcmp.lt.s32.totalorder %v64, 0
    %v693 = vand.u32 %v64, 2139095040
    %v694 = vshrl.u32 %v693, 23
    %v695 = vsub.s32 %v694, 127
    %v696 = vand.u32 2147483647, %v64
    %v697 = vand.u32 %v696, 8388607
    %v698 = vor.u32 %v697, 8388608
    %v699 = vsub.s32 0, %v698
    %v700 = vadd.s32 %v695, 1
    %vm701 = vcmp.gt.s32.totalorder %v700, 0
    %v702 = vsel %vm701, %v700, 0
    %v703 = vshrl.u32 %v702, 5
    %v704 = vand.u32 %v702, 31
    %v705 = vsub.s32 32, %v704
    %v706 = vshrl.u32 683565275, %v705
    %v707 = vshll.u32 683565275, %v704
    %v708 = vshrl.u32 2475754826, %v705
    %v709 = vor.u32 %v707, %v708
    %v710 = vshll.u32 2475754826, %v704
    %v711 = vshrl.u32 2131351028, %v705
    %v712 = vor.u32 %v710, %v711
    %v713 = vshll.u32 2131351028, %v704
    %v714 = vshrl.u32 2102212464, %v705
    %v715 = vor.u32 %v713, %v714
    %v716 = vshll.u32 2102212464, %v704
    %v717 = vshrl.u32 920167782, %v705
    %v718 = vor.u32 %v716, %v717
    %v719 = vshll.u32 920167782, %v704
    %v720 = vshrl.u32 1326507024, %v705
    %v721 = vor.u32 %v719, %v720
    %vm722 = vcmp.lt.s32.totalorder %v703, 1
    %vm723 = vcmp.lt.s32.totalorder %v703, 2
    %vm724 = vcmp.lt.s32.totalorder %v703, 3
    %vm725 = vcmp.lt.s32.totalorder %v703, 4
    %v726 = vsel %vm722, %v706, %v709
    %v727 = vsel %vm725, %v715, 2102212464
    %v728 = vsel %vm724, %v712, %v727
    %v729 = vsel %vm723, %v726, %v728
    %v730 = vsel %vm722, %v709, %v712
    %v731 = vsel %vm725, %v718, 920167782
    %v732 = vsel %vm724, %v715, %v731
    %v733 = vsel %vm723, %v730, %v732
    %v734 = vsel %vm722, %v712, %v715
    %v735 = vsel %vm725, %v721, 1326507024
    %v736 = vsel %vm724, %v718, %v735
    %v737 = vsel %vm723, %v734, %v736
    %v738 = vshll.u32 %v698, 8
    %v739 = vmul.u32.u64.compose %v738, %v737
    %v740 = vextract.low.u32 %v739
    %v741 = vextract.high.u32 %v739
    %v742 = vmul.u32.u64.compose %v738, %v733
    %v743 = vextract.low.u32 %v742
    %v744 = vextract.high.u32 %v742
    %v745 = vmul.u32 %v738, %v729
    %v746 = vadd.s32 %v741, %v743
    %vm747 = vc.u32 %v741, %v743
    %v748 = vadd.s32 %v744, 1
    %v749 = vsel %vm747, %v748, %v744
    %v750 = vadd.s32 %v745, %v749
    %v751 = vadd.s32 %v750, 536870912
    %v752 = vshrl.u32 %v751, 30
    %v753 = vshll.u32 %v752, 30
    %v754 = vsub.s32 %v750, %v753
    %vm755 = vcmp.lt.s32.totalorder %v754, 0
    %v756 = vsub.s32 0, %v754
    %v757 = vsel %vm755, %v756, %v754
    %v758 = vclz %v757
    %v759 = vsub.s32 %v758, 2
    %vm760 = vcmp.gt.s32.totalorder 0, %v759
    %v761 = vsel %vm760, 0, %v759
    %v762 = vsub.s32 32, %v761
    %v763 = vshll.u32 %v754, %v761
    %v764 = vshrl.u32 %v746, %v762
    %v765 = vor.u32 %v763, %v764
    %v766 = vsub.s32 4294967266, %v761
    %v767 = vadd.s32 %v766, 127
    %v768 = vshll.u32 %v767, 23
    %v769 = vor.u32 4788187, %v768
    %v770 = vand.u32 2147483647, %v769
    %v772 = vcvt.s32.f32 %v765
    %v773 = vmul.f32 %v772, %v770
    %v774 = vxor.u32 %v773, 2147483648
    %v775 = vsel %vm692, %v774, %v773
    %v776 = vsub.s32 4, %v752
    %v777 = vsel %vm692, %v776, %v752
    %v778 = vsel %vm691, %v64, %v775
    %v779 = vsel %vm691, 0, %v777
    %v780 = vcosq.f32.pop %v778
    %v781 = vsinq.f32.pop %v778
    %vm782 = vweird.f32 %v64
    %v783 = vadd.s32 %v779, 3
    %v784 = vand.u32 %v783, 3
    %vm785 = vcmp.lt.s32.totalorder %v784, 2
    %vm786 = vcmp.eq.s32.totalorder %v784, 0
    %v787 = vxor.u32 %v781, 2147483648
    %v788 = vsel %vm786, %v780, %v787
    %vm789 = vcmp.eq.s32.totalorder %v784, 2
    %v790 = vxor.u32 %v780, 2147483648
    %v791 = vsel %vm789, %v790, %v781
    %v792 = vsel %vm785, %v788, %v791
    %v793 = vsel %vm782, nan, %v792
    %v794 = vand.u32 2147483647, %v65
    %vm795 = vcmp.le.f32.partialorder %v794, 0.7853982
    %vm796 = vcmp.lt.s32.totalorder %v65, 0
    %v797 = vand.u32 %v65, 2139095040
    %v798 = vshrl.u32 %v797, 23
    %v799 = vsub.s32 %v798, 127
    %v800 = vand.u32 2147483647, %v65
    %v801 = vand.u32 %v800, 8388607
    %v802 = vor.u32 %v801, 8388608
    %v803 = vsub.s32 0, %v802
    %v804 = vadd.s32 %v799, 1
    %vm805 = vcmp.gt.s32.totalorder %v804, 0
    %v806 = vsel %vm805, %v804, 0
    %v807 = vshrl.u32 %v806, 5
    %v808 = vand.u32 %v806, 31
    %v809 = vsub.s32 32, %v808
    %v810 = vshrl.u32 683565275, %v809
    %v811 = vshll.u32 683565275, %v808
    %v812 = vshrl.u32 2475754826, %v809
    %v813 = vor.u32 %v811, %v812
    %v814 = vshll.u32 2475754826, %v808
    %v815 = vshrl.u32 2131351028, %v809
    %v816 = vor.u32 %v814, %v815
    %v817 = vshll.u32 2131351028, %v808
    %v818 = vshrl.u32 2102212464, %v809
    %v819 = vor.u32 %v817, %v818
    %v820 = vshll.u32 2102212464, %v808
    %v821 = vshrl.u32 920167782, %v809
    %v822 = vor.u32 %v820, %v821
    %v823 = vshll.u32 920167782, %v808
    %v824 = vshrl.u32 1326507024, %v809
    %v825 = vor.u32 %v823, %v824
    %vm826 = vcmp.lt.s32.totalorder %v807, 1
    %vm827 = vcmp.lt.s32.totalorder %v807, 2
    %vm828 = vcmp.lt.s32.totalorder %v807, 3
    %vm829 = vcmp.lt.s32.totalorder %v807, 4
    %v830 = vsel %vm826, %v810, %v813
    %v831 = vsel %vm829, %v819, 2102212464
    %v832 = vsel %vm828, %v816, %v831
    %v833 = vsel %vm827, %v830, %v832
    %v834 = vsel %vm826, %v813, %v816
    %v835 = vsel %vm829, %v822, 920167782
    %v836 = vsel %vm828, %v819, %v835
    %v837 = vsel %vm827, %v834, %v836
    %v838 = vsel %vm826, %v816, %v819
    %v839 = vsel %vm829, %v825, 1326507024
    %v840 = vsel %vm828, %v822, %v839
    %v841 = vsel %vm827, %v838, %v840
    %v842 = vshll.u32 %v802, 8
    %v843 = vmul.u32.u64.compose %v842, %v841
    %v844 = vextract.low.u32 %v843
    %v845 = vextract.high.u32 %v843
    %v846 = vmul.u32.u64.compose %v842, %v837
    %v847 = vextract.low.u32 %v846
    %v848 = vextract.high.u32 %v846
    %v849 = vmul.u32 %v842, %v833
    %v850 = vadd.s32 %v845, %v847
    %vm851 = vc.u32 %v845, %v847
    %v852 = vadd.s32 %v848, 1
    %v853 = vsel %vm851, %v852, %v848
    %v854 = vadd.s32 %v849, %v853
    %v855 = vadd.s32 %v854, 536870912
    %v856 = vshrl.u32 %v855, 30
    %v857 = vshll.u32 %v856, 30
    %v858 = vsub.s32 %v854, %v857
    %vm859 = vcmp.lt.s32.totalorder %v858, 0
    %v860 = vsub.s32 0, %v858
    %v861 = vsel %vm859, %v860, %v858
    %v862 = vclz %v861
    %v863 = vsub.s32 %v862, 2
    %vm864 = vcmp.gt.s32.totalorder 0, %v863
    %v865 = vsel %vm864, 0, %v863
    %v866 = vsub.s32 32, %v865
    %v867 = vshll.u32 %v858, %v865
    %v868 = vshrl.u32 %v850, %v866
    %v869 = vor.u32 %v867, %v868
    %v870 = vsub.s32 4294967266, %v865
    %v871 = vadd.s32 %v870, 127
    %v872 = vshll.u32 %v871, 23
    %v873 = vor.u32 4788187, %v872
    %v874 = vand.u32 2147483647, %v873
    %v876 = vcvt.s32.f32 %v869
    %v877 = vmul.f32 %v876, %v874
    %v878 = vxor.u32 %v877, 2147483648
    %v879 = vsel %vm796, %v878, %v877
    %v880 = vsub.s32 4, %v856
    %v881 = vsel %vm796, %v880, %v856
    %v882 = vsel %vm795, %v65, %v879
    %v883 = vsel %vm795, 0, %v881
    %v884 = vcosq.f32.pop %v882
    %v885 = vsinq.f32.pop %v882
    %vm886 = vweird.f32 %v65
    %v887 = vadd.s32 %v883, 3
    %v888 = vand.u32 %v887, 3
    %vm889 = vcmp.lt.s32.totalorder %v888, 2
    %vm890 = vcmp.eq.s32.totalorder %v888, 0
    %v891 = vxor.u32 %v885, 2147483648
    %v892 = vsel %vm890, %v884, %v891
    %vm893 = vcmp.eq.s32.totalorder %v888, 2
    %v894 = vxor.u32 %v884, 2147483648
    %v895 = vsel %vm893, %v894, %v885
    %v896 = vsel %vm889, %v892, %v895
    %v897 = vsel %vm886, nan, %v896
    %v898 = vld [vmem:[#allocation2] sm:$0x3]
    %v899 = vld [vmem:[#allocation2 + $0x2] sm:$0x3]
    %v900 = vld [vmem:[#allocation2 + $0x4] sm:$0x3]
    %v901 = vld [vmem:[#allocation2 + $0x6] sm:$0x3]
    %v902 = vld [vmem:[#allocation2 + $0x8] sm:$0x3]
    %v903 = vld [vmem:[#allocation2 + $0xa] sm:$0x3]
    %v904 = vld [vmem:[#allocation2 + $0xc] sm:$0x3]
    %v905 = vld [vmem:[#allocation2 + $0xe] sm:$0x3]
    %v906 = vadd.f32 %v898, %v169
    %v907 = vadd.f32 %v899, %v273
    %v908 = vadd.f32 %v900, %v377
    %v909 = vadd.f32 %v901, %v481
    %v910 = vadd.f32 %v902, %v585
    %v911 = vadd.f32 %v903, %v689
    %v912 = vadd.f32 %v904, %v793
    %v913 = vadd.f32 %v905, %v897
    %vm914 = vcmask 254976
    %915 = vst.msk [vmem:[#allocation5] sm:$0x3] %vm914, %v906
    %916 = vst.msk [vmem:[#allocation5 + $0x2] sm:$0x3] %vm914, %v907
    %917 = vst.msk [vmem:[#allocation5 + $0x4] sm:$0x3] %vm914, %v908
    %918 = vst.msk [vmem:[#allocation5 + $0x6] sm:$0x3] %vm914, %v909
    %919 = vst.msk [vmem:[#allocation5 + $0x8] sm:$0x3] %vm914, %v910
    %920 = vst.msk [vmem:[#allocation5 + $0xa] sm:$0x3] %vm914, %v911
    %921 = vst.msk [vmem:[#allocation5 + $0xc] sm:$0x3] %vm914, %v912
    %922 = vst.msk [vmem:[#allocation5 + $0xe] sm:$0x3] %vm914, %v913
    // Predicated region
    $region10: #{tpu_custom_call.1} parent=1 // pred_check
      _
    $region11: #{tpu_custom_call.1} parent=1 // pred_check_branch
      %924 = sbr.rel (0) target = $region13
    $region12: #{tpu_custom_call.1} parent=1 // pred_region
      %s926 = ssub.s32 256, 256
      %927 = vsyncadd [#allocation4], %s926
      %s928 = sshll.u32 [#allocation5], 4
      %s929 = int_to_ptr.vmem [resolvable:$true] %s928
      %934 = dma.vmem_to_hbm [thread:$0]  %s929, 256, %s1, [#allocation4], 32, 32, 2
    $region13: #{tpu_custom_call.1} parent=1 // pred_fallthru
      _
    // Predicated region
    $region14: #{tpu_custom_call.1} parent=1 // pred_check
      _
    $region15: #{tpu_custom_call.1} parent=1 // pred_check_branch
      %936 = sbr.rel (0) target = $region17
    $region16: #{tpu_custom_call.1} parent=1 // pred_region
      %937 = dma.done [#allocation4], 256
    $region17: #{tpu_custom_call.1} parent=1 // pred_fallthru
      _
    %938 = vsyncpa [#allocation3], 1
    %939 = vsyncpa [#allocation4], 1

</llo_original>
